<compile_context>
chip_gen: v6e
topology: v6e:2x2x1
jax: 0.10.0
libtpu: 0.0.40
codegen_flags: <defaults>
</compile_context>

<pallas_src>
import functools

import jax
import jax.numpy as jnp
import numpy as np
from jax import lax
from jax.experimental import pallas as pl
from jax.experimental.pallas import tpu as pltpu

ALPHA = 0.25
GAMMA = 2.0          # hard-coded (==2) -> implemented as an explicit square
EPS = 1e-8
_PAD_LOGIT = -30.0   # sigmoid(-30) ~ 9e-14 -> focal_zero == 0 on padded token columns


def _matcher_cost_kernel(logits_ref, ofeat_ref, pm_ref, tfeat_ref, c_ref, *,
                         cost_class, cost_bbox, cost_giou):
    # ---------------- classification (focal) cost ----------------
    # softplus(x)  = relu(x) + log(1 + exp(-|x|))
    # -log(1-p)    = softplus(x)      -log(p) = softplus(-x)      p = exp(-softplus(-x))
    x = logits_ref[...]                                 # [TQ, T_pad] f32
    e = jnp.exp(-jnp.abs(x))                            # EUP: exp
    sp = jnp.log(1.0 + e)                               # EUP: log
    softplus_x = jnp.maximum(x, 0.0) + sp               # -log(1 - p)
    softplus_nx = softplus_x - x                        # -log(p)
    p = jnp.exp(-softplus_nx)                           # EUP: sigmoid(x) with no divide / where
    omp = 1.0 - p

    # focal_zero = -(1-a) * p^2    * log(1-p)
    # focal_one  = -   a * (1-p)^2 * log(p)
    focal_zero = (1.0 - ALPHA) * (p * p) * softplus_x              # [TQ, T_pad]
    delta = ALPHA * (omp * omp) * softplus_nx - focal_zero         # focal_one - focal_zero
    fz_sum = jnp.sum(focal_zero, axis=-1, keepdims=True)           # [TQ, 1]

    # gather(index=pm) then sum over tokens  ==  fz.sum(-1) + (fo - fz) @ pm^T   (MXU)
    pm = pm_ref[...]                                    # [G_pad, T_pad] 0/1 floats
    ce = fz_sum + lax.dot_general(
        delta, pm,
        dimension_numbers=(((1,), (1,)), ((), ())),
        preferred_element_type=jnp.float32)             # [TQ, G_pad]

    # ---------------- box features (precomputed in wrapper) ----------------
    of = ofeat_ref[...]                                 # [TQ, 16]
    ocx, ocy, ow, oh = of[:, 0:1], of[:, 1:2], of[:, 2:3], of[:, 3:4]
    ox0, oy0, ox1, oy1 = of[:, 4:5], of[:, 5:6], of[:, 6:7], of[:, 7:8]
    area_o = of[:, 8:9]                                 # [TQ, 1]

    tf = tfeat_ref[...]                                 # [16, G_pad]
    tcx, tcy, tw, th = tf[0:1, :], tf[1:2, :], tf[2:3, :], tf[3:4, :]
    tx0, ty0, tx1, ty1 = tf[4:5, :], tf[5:6, :], tf[6:7, :], tf[7:8, :]
    area_t = tf[8:9, :]                                 # [1, G_pad]

    # ---------------- L1 box cost (cdist p=1) ----------------
    l1 = (jnp.abs(ocx - tcx) + jnp.abs(ocy - tcy)
          + jnp.abs(ow - tw) + jnp.abs(oh - th))        # [TQ, G_pad]

    # ---------------- GIoU cost (single fused divide) ----------------
    iw = jnp.maximum(jnp.minimum(ox1, tx1) - jnp.maximum(ox0, tx0), 0.0)
    ih = jnp.maximum(jnp.minimum(oy1, ty1) - jnp.maximum(oy0, ty0), 0.0)
    inter = iw * ih                                     # [TQ, G_pad]
    union = area_o + area_t - inter
    ew = jnp.maximum(ox1, tx1) - jnp.minimum(ox0, tx0)  # enclosing extents are >= 0
    eh = jnp.maximum(oy1, ty1) - jnp.minimum(oy0, ty0)
    earea = ew * eh
    # giou = inter/union - (earea-union)/earea = (inter*earea - (earea-union)*union)/(union*earea)
    giou = (inter * earea - (earea - union) * union) / (union * earea)

    c_ref[...] = cost_bbox * l1 + cost_class * ce + cost_giou * (-giou)


def _round_up(a, b):
    return -(-a // b) * b


def _vmem_capacity_bytes():
    """Generation-aware VMEM capacity (64 MiB on v7x, 128 MiB on v5e/v6e)."""
    try:
        info = pltpu.get_tpu_info()
        v = getattr(info, "vmem_capacity_bytes", None)
        if v:
            return int(v)
    except Exception:
        pass
    return 64 * 1024 * 1024   # conservative (v7x) fallback


def hungarian_matcher_cost(pred_logits, pred_boxes, positive_map, tgt_boxes,
                           cost_class=1.0, cost_bbox=1.0, cost_giou=1.0):
    """Returns the matching cost matrix C of shape [bs, num_queries, num_gt]."""
    bs, nq, tok = pred_logits.shape
    num_gt = positive_map.shape[0]
    q = bs * nq
    q8 = _round_up(q, 8)

    tok_pad = _round_up(tok, 128)      # lane-dense focal plane / full MXU K dim
    g_pad = _round_up(num_gt, 128)     # lane-dense output / full MXU N dim

    # ---- VMEM-aware tile sizing ----
    vmem_bytes = _vmem_capacity_bytes()
    per_row = 2 * 4 * (tok_pad + g_pad + 16)              # Q-tiled, double-buffered blocks
    resident = 2 * 4 * (g_pad * tok_pad + 16 * g_pad)     # pm + tfeat (constant index_map)
    budget = int(vmem_bytes * 0.4)
    if budget > resident + 8 * per_row:
        tq = ((budget - resident) // per_row) // 8 * 8
    else:
        tq = 8
    tq = max(8, min(2048, tq))
    if q8 >= 16:
        # >= 2 grid steps so the single "parallel" axis can feed both v7x TensorCores
        tq = min(tq, _round_up(-(-q8 // 2), 8))
    tq = max(8, min(tq, q8))
    q_pad = _round_up(q, tq)

    used = resident + per_row * tq
    vmem_limit = int(min(vmem_bytes - (2 << 20),
                         max(int(used * 1.5) + (8 << 20), 32 << 20)))

    dummy_box = jnp.array([0.5, 0.5, 1.0, 1.0], jnp.float32)  # non-degenerate pad box

    # ---- logits: pad tokens with a large negative (focal_zero ~ 0 there), rows with zeros ----
    logits2d = pred_logits.reshape(q, tok).astype(jnp.float32)
    if tok_pad > tok:
        logits2d = jnp.concatenate(
            [logits2d, jnp.full((q, tok_pad - tok), _PAD_LOGIT, jnp.float32)], axis=1)
    if q_pad > q:
        logits2d = jnp.concatenate(
            [logits2d, jnp.zeros((q_pad - q, tok_pad), jnp.float32)], axis=0)

    boxes2d = pred_boxes.reshape(q, 4).astype(jnp.float32)
    if q_pad > q:
        boxes2d = jnp.concatenate(
            [boxes2d, jnp.broadcast_to(dummy_box, (q_pad - q, 4))], axis=0)

    pm = positive_map.astype(jnp.float32)
    if tok_pad > tok:
        pm = jnp.concatenate([pm, jnp.zeros((num_gt, tok_pad - tok), jnp.float32)], axis=1)
    if g_pad > num_gt:
        pm = jnp.concatenate([pm, jnp.zeros((g_pad - num_gt, tok_pad), jnp.float32)], axis=0)

    tgt = tgt_boxes.astype(jnp.float32)
    if g_pad > num_gt:
        tgt = jnp.concatenate(
            [tgt, jnp.broadcast_to(dummy_box, (g_pad - num_gt, 4))], axis=0)

    # ---- precompute prediction-side box features (hoisted out of the kernel) ----
    ocx, ocy, ow, oh = boxes2d[:, 0], boxes2d[:, 1], boxes2d[:, 2], boxes2d[:, 3]
    ox0, oy0 = ocx - 0.5 * ow, ocy - 0.5 * oh
    ox1, oy1 = ocx + 0.5 * ow, ocy + 0.5 * oh
    area_o = (ox1 - ox0) * (oy1 - oy0)
    ofeat = jnp.stack([ocx, ocy, ow, oh, ox0, oy0, ox1, oy1, area_o], axis=1)   # [q_pad, 9]
    ofeat = jnp.concatenate([ofeat, jnp.zeros((q_pad, 7), jnp.float32)], axis=1)  # [q_pad, 16]

    # ---- precompute target-side box features ----
    tcx, tcy, tw, th = tgt[:, 0], tgt[:, 1], tgt[:, 2], tgt[:, 3]
    tx0, ty0 = tcx - 0.5 * tw, tcy - 0.5 * th
    tx1, ty1 = tcx + 0.5 * tw, tcy + 0.5 * th
    area_t = (tx1 - tx0) * (ty1 - ty0)
    tfeat = jnp.stack([tcx, tcy, tw, th, tx0, ty0, tx1, ty1, area_t], axis=0)     # [9, g_pad]
    tfeat = jnp.concatenate([tfeat, jnp.zeros((7, g_pad), jnp.float32)], axis=0)  # [16, g_pad]

    kernel = functools.partial(_matcher_cost_kernel,
                               cost_class=float(cost_class),
                               cost_bbox=float(cost_bbox),
                               cost_giou=float(cost_giou))

    c = pl.pallas_call(
        kernel,
        out_shape=jax.ShapeDtypeStruct((q_pad, g_pad), jnp.float32),
        grid=(q_pad // tq,),
        in_specs=[
            pl.BlockSpec((tq, tok_pad), lambda i: (i, 0)),    # logits: tiled over Q
            pl.BlockSpec((tq, 16), lambda i: (i, 0)),         # pred box feats: tiled over Q
            pl.BlockSpec((g_pad, tok_pad), lambda i: (0, 0)), # positive_map: VMEM-resident
            pl.BlockSpec((16, g_pad), lambda i: (0, 0)),      # target feats: VMEM-resident
        ],
        out_specs=pl.BlockSpec((tq, g_pad), lambda i: (i, 0)),
        compiler_params=pltpu.CompilerParams(
            dimension_semantics=("parallel",),                # megacore on v7x
            vmem_limit_bytes=vmem_limit),
    )(logits2d, ofeat, pm, tfeat)

    return c[:q, :num_gt].reshape(bs, nq, num_gt)


# ---------------------------- pure-JAX reference ----------------------------
def _reference_cost(pred_logits, pred_boxes, positive_map, tgt_boxes,
                    cost_class=1.0, cost_bbox=1.0, cost_giou=1.0):
    bs, nq, tok = pred_logits.shape
    num_gt = positive_map.shape[0]
    out_prob = jax.nn.sigmoid(pred_logits.reshape(bs * nq, tok))
    out_bbox = pred_boxes.reshape(bs * nq, 4)

    op = jnp.broadcast_to(out_prob[:, None, :], (bs * nq, num_gt, tok))
    pm = jnp.broadcast_to(positive_map[None, :, :], (bs * nq, num_gt, tok))
    npos = jnp.stack([1.0 - op, op], axis=-1) + EPS
    weight = jnp.power(1.0 - npos, GAMMA)
    f0 = -weight[..., 0] * jnp.log(npos[..., 0]) * (1.0 - ALPHA)
    f1 = -weight[..., 1] * jnp.log(npos[..., 1]) * ALPHA
    focal = jnp.stack([f0, f1], axis=-1)
    ce = jnp.take_along_axis(focal, pm.astype(jnp.int32)[..., None], axis=-1)
    ce = ce[..., 0].sum(-1)

    cb = jnp.abs(out_bbox[:, None, :] - tgt_boxes[None, :, :]).sum(-1)

    def to_xyxy(b):
        cx, cy, w, h = b[..., 0], b[..., 1], b[..., 2], b[..., 3]
        return jnp.stack([cx - w / 2, cy - h / 2, cx + w / 2, cy + h / 2], -1)

    b1, b2 = to_xyxy(out_bbox), to_xyxy(tgt_boxes)
    a1 = (b1[:, 2] - b1[:, 0]) * (b1[:, 3] - b1[:, 1])
    a2 = (b2[:, 2] - b2[:, 0]) * (b2[:, 3] - b2[:, 1])
    lt = jnp.maximum(b1[:, None, :2], b2[None, :, :2])
    rb = jnp.minimum(b1[:, None, 2:], b2[None, :, 2:])
    wh = jnp.clip(rb - lt, 0.0, None)
    inter = wh[..., 0] * wh[..., 1]
    union = a1[:, None] + a2[None, :] - inter
    iou = inter / union
    elt = jnp.minimum(b1[:, None, :2], b2[None, :, :2])
    erb = jnp.maximum(b1[:, None, 2:], b2[None, :, 2:])
    ewh = jnp.clip(erb - elt, 0.0, None)
    earea = ewh[..., 0] * ewh[..., 1]
    giou = iou - (earea - union) / earea

    c = cost_bbox * cb + cost_class * ce + cost_giou * (-giou)
    return c.reshape(bs, nq, num_gt)


if __name__ == "__main__":
    key = jax.random.PRNGKey(0)
    bs, num_queries, token_nums = 2, 8, 32
    sizes = [2, 3]                    # ground-truth boxes per batch element
    num_gt = sum(sizes)

    k1, k2, k3, k4, k5 = jax.random.split(key, 5)
    pred_logits = jax.random.normal(k1, (bs, num_queries, token_nums), jnp.float32)
    # valid cxcywh predictions
    pred_cxcy = jax.random.uniform(k2, (bs, num_queries, 2), minval=0.2, maxval=0.8)
    pred_wh = jax.random.uniform(k3, (bs, num_queries, 2), minval=0.1, maxval=0.4)
    pred_boxes = jnp.concatenate([pred_cxcy, pred_wh], axis=-1)

    # targets: list of per-image tensors [n_b, 6]; columns 1:-1 are cxcywh boxes
    tgt_cxcy = jax.random.uniform(k4, (num_gt, 2), minval=0.25, maxval=0.75)
    tgt_wh = jax.random.uniform(k5, (num_gt, 2), minval=0.1, maxval=0.3)
    tgt_bbox = jnp.concatenate([tgt_cxcy, tgt_wh], axis=-1)
    labels = jnp.arange(num_gt, dtype=jnp.float32)[:, None]
    extra = jnp.zeros((num_gt, 1), jnp.float32)
    full_targets = jnp.concatenate([labels, tgt_bbox, extra], axis=-1)  # [num_gt, 6]
    targets = [full_targets[:sizes[0]], full_targets[sizes[0]:]]
    tgt_bbox_cat = jnp.concatenate([v[:, 1:-1] for v in targets], axis=0)

    positive_map = (jax.random.uniform(jax.random.PRNGKey(1),
                                       (num_gt, token_nums)) < 0.15).astype(jnp.float32)

    C = hungarian_matcher_cost(pred_logits, pred_boxes, positive_map, tgt_bbox_cat,
                               cost_class=1.0, cost_bbox=1.0, cost_giou=1.0)
    C = jax.block_until_ready(C)

    C_ref = _reference_cost(pred_logits, pred_boxes, positive_map, tgt_bbox_cat)
    np.testing.assert_allclose(np.asarray(C), np.asarray(C_ref), rtol=1e-4, atol=1e-4)

    # Hungarian assignment (sequential combinatorial algorithm) stays on host.
    # TODO(synk): linear_sum_assignment has no clean Pallas/TPU equivalent.
    try:
        from scipy.optimize import linear_sum_assignment
        C_np = np.asarray(C)
        offsets = np.cumsum([0] + sizes)
        indices = []
        for i in range(bs):
            c_i = C_np[i, :, offsets[i]:offsets[i + 1]]
            row, col = linear_sum_assignment(c_i)
            indices.append((np.asarray(row, np.int64), np.asarray(col, np.int64)))
    except ImportError:
        indices = None

    print("KERNEL_OK")
</pallas_src>

<mosaic_0001>
module attributes {stable_mosaic.version = 11 : i64} {
  func.func @_matcher_cost_kernel(%arg0: i32, %arg1: memref<8x128xf32, #tpu.memory_space<vmem>>, %arg2: memref<8x16xf32, #tpu.memory_space<vmem>>, %arg3: memref<128x128xf32, #tpu.memory_space<vmem>>, %arg4: memref<16x128xf32, #tpu.memory_space<vmem>>, %arg5: memref<8x128xf32, #tpu.memory_space<vmem>>) attributes {dimension_semantics = [#tpu.dimension_semantics<parallel>], iteration_bounds = array<i64: 2>, scalar_prefetch = 0 : i64, scratch_operands = 0 : i64, tpu.core_type = #tpu.core_type<tc>, window_params = [{transform_indices = @transform_0, window_bounds = array<i64: 8, 128>}, {transform_indices = @transform_1, window_bounds = array<i64: 8, 16>}, {pipeline_mode = #tpu.pipeline_mode<synchronous>, transform_indices = @transform_2, window_bounds = array<i64: 128, 128>}, {pipeline_mode = #tpu.pipeline_mode<synchronous>, transform_indices = @transform_3, window_bounds = array<i64: 16, 128>}, {transform_indices = @transform_4, window_bounds = array<i64: 8, 128>}]} {
    %c0 = arith.constant 0 : index
    %c0_0 = arith.constant 0 : index
    %0 = vector.load %arg1[%c0, %c0_0] : memref<8x128xf32, #tpu.memory_space<vmem>>, vector<8x128xf32>
    %1 = math.absf %0 : vector<8x128xf32>
    %cst = arith.constant 0.000000e+00 : f32
    %2 = vector.broadcast %cst : f32 to vector<8x128xf32>
    %3 = arith.subf %2, %1 : vector<8x128xf32>
    %4 = math.exp %3 : vector<8x128xf32>
    %cst_1 = arith.constant 1.000000e+00 : f32
    %5 = vector.broadcast %cst_1 : f32 to vector<8x128xf32>
    %6 = arith.addf %5, %4 : vector<8x128xf32>
    %7 = math.log %6 : vector<8x128xf32>
    %cst_2 = arith.constant 0.000000e+00 : f32
    %8 = vector.broadcast %cst_2 : f32 to vector<8x128xf32>
    %9 = arith.maximumf %0, %8 : vector<8x128xf32>
    %10 = arith.addf %9, %7 : vector<8x128xf32>
    %11 = arith.subf %10, %0 : vector<8x128xf32>
    %cst_3 = arith.constant 0.000000e+00 : f32
    %12 = vector.broadcast %cst_3 : f32 to vector<8x128xf32>
    %13 = arith.subf %12, %11 : vector<8x128xf32>
    %14 = math.exp %13 : vector<8x128xf32>
    %cst_4 = arith.constant 1.000000e+00 : f32
    %15 = vector.broadcast %cst_4 : f32 to vector<8x128xf32>
    %16 = arith.subf %15, %14 : vector<8x128xf32>
    %17 = arith.mulf %14, %14 : vector<8x128xf32>
    %cst_5 = arith.constant 7.500000e-01 : f32
    %18 = vector.broadcast %cst_5 : f32 to vector<8x128xf32>
    %19 = arith.mulf %18, %17 : vector<8x128xf32>
    %20 = arith.mulf %19, %10 : vector<8x128xf32>
    %21 = arith.mulf %16, %16 : vector<8x128xf32>
    %cst_6 = arith.constant 2.500000e-01 : f32
    %22 = vector.broadcast %cst_6 : f32 to vector<8x128xf32>
    %23 = arith.mulf %22, %21 : vector<8x128xf32>
    %24 = arith.mulf %23, %11 : vector<8x128xf32>
    %25 = arith.subf %24, %20 : vector<8x128xf32>
    %cst_7 = arith.constant dense<0.000000e+00> : vector<8xf32>
    %26 = vector.multi_reduction <add>, %20, %cst_7 [1] : vector<8x128xf32> to vector<8xf32>
    %27 = vector.shape_cast %26 : vector<8xf32> to vector<8x1xf32>
    %c0_8 = arith.constant 0 : index
    %c0_9 = arith.constant 0 : index
    %28 = vector.load %arg3[%c0_8, %c0_9] : memref<128x128xf32, #tpu.memory_space<vmem>>, vector<128x128xf32>
    %cst_10 = arith.constant dense<0.000000e+00> : vector<8x128xf32>
    %29 = tpu.matmul %25, %28, %cst_10 {dimension_numbers = #tpu.dot_dimension_numbers<[1], [1], [0], [0], [0, 0, 1, 0], [], []>} : vector<8x128xf32>, vector<128x128xf32>, vector<8x128xf32> -> vector<8x128xf32>
    %30 = vector.broadcast %27 : vector<8x1xf32> to vector<8x128xf32>
    %31 = arith.addf %30, %29 : vector<8x128xf32>
    %c0_11 = arith.constant 0 : index
    %c0_12 = arith.constant 0 : index
    %32 = vector.load %arg2[%c0_11, %c0_12] : memref<8x16xf32, #tpu.memory_space<vmem>>, vector<8x16xf32>
    %33 = vector.extract_strided_slice %32 {offsets = [0, 0], sizes = [8, 1], strides = [1, 1]} : vector<8x16xf32> to vector<8x1xf32>
    %34 = vector.extract_strided_slice %32 {offsets = [0, 1], sizes = [8, 1], strides = [1, 1]} : vector<8x16xf32> to vector<8x1xf32>
    %35 = vector.extract_strided_slice %32 {offsets = [0, 2], sizes = [8, 1], strides = [1, 1]} : vector<8x16xf32> to vector<8x1xf32>
    %36 = vector.extract_strided_slice %32 {offsets = [0, 3], sizes = [8, 1], strides = [1, 1]} : vector<8x16xf32> to vector<8x1xf32>
    %37 = vector.extract_strided_slice %32 {offsets = [0, 4], sizes = [8, 1], strides = [1, 1]} : vector<8x16xf32> to vector<8x1xf32>
    %38 = vector.extract_strided_slice %32 {offsets = [0, 5], sizes = [8, 1], strides = [1, 1]} : vector<8x16xf32> to vector<8x1xf32>
    %39 = vector.extract_strided_slice %32 {offsets = [0, 6], sizes = [8, 1], strides = [1, 1]} : vector<8x16xf32> to vector<8x1xf32>
    %40 = vector.extract_strided_slice %32 {offsets = [0, 7], sizes = [8, 1], strides = [1, 1]} : vector<8x16xf32> to vector<8x1xf32>
    %41 = vector.extract_strided_slice %32 {offsets = [0, 8], sizes = [8, 1], strides = [1, 1]} : vector<8x16xf32> to vector<8x1xf32>
    %c0_13 = arith.constant 0 : index
    %c0_14 = arith.constant 0 : index
    %42 = vector.load %arg4[%c0_13, %c0_14] : memref<16x128xf32, #tpu.memory_space<vmem>>, vector<16x128xf32>
    %43 = vector.extract_strided_slice %42 {offsets = [0, 0], sizes = [1, 128], strides = [1, 1]} : vector<16x128xf32> to vector<1x128xf32>
    %44 = vector.extract_strided_slice %42 {offsets = [1, 0], sizes = [1, 128], strides = [1, 1]} : vector<16x128xf32> to vector<1x128xf32>
    %45 = vector.extract_strided_slice %42 {offsets = [2, 0], sizes = [1, 128], strides = [1, 1]} : vector<16x128xf32> to vector<1x128xf32>
    %46 = vector.extract_strided_slice %42 {offsets = [3, 0], sizes = [1, 128], strides = [1, 1]} : vector<16x128xf32> to vector<1x128xf32>
    %47 = vector.extract_strided_slice %42 {offsets = [4, 0], sizes = [1, 128], strides = [1, 1]} : vector<16x128xf32> to vector<1x128xf32>
    %48 = vector.extract_strided_slice %42 {offsets = [5, 0], sizes = [1, 128], strides = [1, 1]} : vector<16x128xf32> to vector<1x128xf32>
    %49 = vector.extract_strided_slice %42 {offsets = [6, 0], sizes = [1, 128], strides = [1, 1]} : vector<16x128xf32> to vector<1x128xf32>
    %50 = vector.extract_strided_slice %42 {offsets = [7, 0], sizes = [1, 128], strides = [1, 1]} : vector<16x128xf32> to vector<1x128xf32>
    %51 = vector.extract_strided_slice %42 {offsets = [8, 0], sizes = [1, 128], strides = [1, 1]} : vector<16x128xf32> to vector<1x128xf32>
    %52 = vector.broadcast %33 : vector<8x1xf32> to vector<8x128xf32>
    %53 = vector.broadcast %43 : vector<1x128xf32> to vector<8x128xf32>
    %54 = arith.subf %52, %53 : vector<8x128xf32>
    %55 = math.absf %54 : vector<8x128xf32>
    %56 = vector.broadcast %34 : vector<8x1xf32> to vector<8x128xf32>
    %57 = vector.broadcast %44 : vector<1x128xf32> to vector<8x128xf32>
    %58 = arith.subf %56, %57 : vector<8x128xf32>
    %59 = math.absf %58 : vector<8x128xf32>
    %60 = arith.addf %55, %59 : vector<8x128xf32>
    %61 = vector.broadcast %35 : vector<8x1xf32> to vector<8x128xf32>
    %62 = vector.broadcast %45 : vector<1x128xf32> to vector<8x128xf32>
    %63 = arith.subf %61, %62 : vector<8x128xf32>
    %64 = math.absf %63 : vector<8x128xf32>
    %65 = arith.addf %60, %64 : vector<8x128xf32>
    %66 = vector.broadcast %36 : vector<8x1xf32> to vector<8x128xf32>
    %67 = vector.broadcast %46 : vector<1x128xf32> to vector<8x128xf32>
    %68 = arith.subf %66, %67 : vector<8x128xf32>
    %69 = math.absf %68 : vector<8x128xf32>
    %70 = arith.addf %65, %69 : vector<8x128xf32>
    %71 = vector.broadcast %39 : vector<8x1xf32> to vector<8x128xf32>
    %72 = vector.broadcast %49 : vector<1x128xf32> to vector<8x128xf32>
    %73 = arith.minimumf %71, %72 : vector<8x128xf32>
    %74 = vector.broadcast %37 : vector<8x1xf32> to vector<8x128xf32>
    %75 = vector.broadcast %47 : vector<1x128xf32> to vector<8x128xf32>
    %76 = arith.maximumf %74, %75 : vector<8x128xf32>
    %77 = arith.subf %73, %76 : vector<8x128xf32>
    %cst_15 = arith.constant 0.000000e+00 : f32
    %78 = vector.broadcast %cst_15 : f32 to vector<8x128xf32>
    %79 = arith.maximumf %77, %78 : vector<8x128xf32>
    %80 = vector.broadcast %40 : vector<8x1xf32> to vector<8x128xf32>
    %81 = vector.broadcast %50 : vector<1x128xf32> to vector<8x128xf32>
    %82 = arith.minimumf %80, %81 : vector<8x128xf32>
    %83 = vector.broadcast %38 : vector<8x1xf32> to vector<8x128xf32>
    %84 = vector.broadcast %48 : vector<1x128xf32> to vector<8x128xf32>
    %85 = arith.maximumf %83, %84 : vector<8x128xf32>
    %86 = arith.subf %82, %85 : vector<8x128xf32>
    %cst_16 = arith.constant 0.000000e+00 : f32
    %87 = vector.broadcast %cst_16 : f32 to vector<8x128xf32>
    %88 = arith.maximumf %86, %87 : vector<8x128xf32>
    %89 = arith.mulf %79, %88 : vector<8x128xf32>
    %90 = vector.broadcast %41 : vector<8x1xf32> to vector<8x128xf32>
    %91 = vector.broadcast %51 : vector<1x128xf32> to vector<8x128xf32>
    %92 = arith.addf %90, %91 : vector<8x128xf32>
    %93 = arith.subf %92, %89 : vector<8x128xf32>
    %94 = vector.broadcast %39 : vector<8x1xf32> to vector<8x128xf32>
    %95 = vector.broadcast %49 : vector<1x128xf32> to vector<8x128xf32>
    %96 = arith.maximumf %94, %95 : vector<8x128xf32>
    %97 = vector.broadcast %37 : vector<8x1xf32> to vector<8x128xf32>
    %98 = vector.broadcast %47 : vector<1x128xf32> to vector<8x128xf32>
    %99 = arith.minimumf %97, %98 : vector<8x128xf32>
    %100 = arith.subf %96, %99 : vector<8x128xf32>
    %101 = vector.broadcast %40 : vector<8x1xf32> to vector<8x128xf32>
    %102 = vector.broadcast %50 : vector<1x128xf32> to vector<8x128xf32>
    %103 = arith.maximumf %101, %102 : vector<8x128xf32>
    %104 = vector.broadcast %38 : vector<8x1xf32> to vector<8x128xf32>
    %105 = vector.broadcast %48 : vector<1x128xf32> to vector<8x128xf32>
    %106 = arith.minimumf %104, %105 : vector<8x128xf32>
    %107 = arith.subf %103, %106 : vector<8x128xf32>
    %108 = arith.mulf %100, %107 : vector<8x128xf32>
    %109 = arith.mulf %89, %108 : vector<8x128xf32>
    %110 = arith.subf %108, %93 : vector<8x128xf32>
    %111 = arith.mulf %110, %93 : vector<8x128xf32>
    %112 = arith.subf %109, %111 : vector<8x128xf32>
    %113 = arith.mulf %93, %108 : vector<8x128xf32>
    %114 = arith.divf %112, %113 : vector<8x128xf32>
    %cst_17 = arith.constant 1.000000e+00 : f32
    %115 = vector.broadcast %cst_17 : f32 to vector<8x128xf32>
    %116 = arith.mulf %115, %70 : vector<8x128xf32>
    %cst_18 = arith.constant 1.000000e+00 : f32
    %117 = vector.broadcast %cst_18 : f32 to vector<8x128xf32>
    %118 = arith.mulf %117, %31 : vector<8x128xf32>
    %119 = arith.addf %116, %118 : vector<8x128xf32>
    %cst_19 = arith.constant 0.000000e+00 : f32
    %120 = vector.broadcast %cst_19 : f32 to vector<8x128xf32>
    %121 = arith.subf %120, %114 : vector<8x128xf32>
    %cst_20 = arith.constant 1.000000e+00 : f32
    %122 = vector.broadcast %cst_20 : f32 to vector<8x128xf32>
    %123 = arith.mulf %122, %121 : vector<8x128xf32>
    %124 = arith.addf %119, %123 : vector<8x128xf32>
    %c0_21 = arith.constant 0 : index
    %c0_22 = arith.constant 0 : index
    %125 = vector.load %arg5[%c0_21, %c0_22] : memref<8x128xf32, #tpu.memory_space<vmem>>, vector<8x128xf32>
    tpu.vector_store %arg5[%c0_21, %c0_22], %124 {strides = array<i32>} : memref<8x128xf32, #tpu.memory_space<vmem>>, vector<8x128xf32>,
    return
  }
  func.func @transform_0(%arg0: i32) -> (i32, i32) {
    %c0_i32 = arith.constant 0 : i32
    %c0_i32_0 = arith.constant 0 : i32
    return %arg0, %c0_i32 : i32, i32
  }
  func.func @transform_1(%arg0: i32) -> (i32, i32) {
    %c0_i32 = arith.constant 0 : i32
    %c0_i32_0 = arith.constant 0 : i32
    return %arg0, %c0_i32 : i32, i32
  }
  func.func @transform_2(%arg0: i32) -> (i32, i32) {
    %c0_i32 = arith.constant 0 : i32
    %c0_i32_0 = arith.constant 0 : i32
    %c0_i32_1 = arith.constant 0 : i32
    return %c0_i32, %c0_i32_0 : i32, i32
  }
  func.func @transform_3(%arg0: i32) -> (i32, i32) {
    %c0_i32 = arith.constant 0 : i32
    %c0_i32_0 = arith.constant 0 : i32
    %c0_i32_1 = arith.constant 0 : i32
    return %c0_i32, %c0_i32_0 : i32, i32
  }
  func.func @transform_4(%arg0: i32) -> (i32, i32) {
    %c0_i32 = arith.constant 0 : i32
    %c0_i32_0 = arith.constant 0 : i32
    return %arg0, %c0_i32 : i32, i32
  }
}

</mosaic_0001>

<llo_original>
// kernel: tpu_custom_call.1
$region0: #{tpu_custom_call.1}
  #allocation0 [shape = 'u32[]', space=smem, size = 0x4, offset = 0x4, fixed_abs, tag = 'smem constant byte address 0x4 - core index']
  #allocation1 [shape = 'u32[144,128]{1,0:T(1,128)}', space=vmem, size = 0x12000, scoped, tag = 'internal scratch']
  %s0 = inlined_call_operand.hbm [shape: f32[16,128], index: 0, kind: input, shape index: {}]
  %s1 = inlined_call_operand.hbm [shape: f32[16,16], index: 1, kind: input, shape index: {}]
  %s2 = inlined_call_operand.hbm [shape: f32[128,128], index: 2, kind: input, shape index: {}]
  %s3 = inlined_call_operand.hbm [shape: f32[16,128], index: 3, kind: input, shape index: {}]
  %s4 = inlined_call_operand.hbm [shape: f32[16,128], index: 4, kind: output, shape index: {}]
  %s5 = sld [smem:[#allocation0]]
  $region65: #{tpu_custom_call.1} parent=0
    _
  %s7 = ssub.s32 1, %s5
  %s8 = scalar_select 0, %s7, %s5
  $region1: #{tpu_custom_call.1} parent=0
    #allocation2 [shape = 'u8[8192]{0}', space=vmem, size = 0x2000, scoped, tag = 'input window, operand 0']
    #allocation3 [shape = 's32[2]{0}', space=sflag, size = 0x8, scoped, tag = 'scoped memory for tpu_custom_call.1']
    #allocation4 [shape = 's32[2]{0}', space=sflag, size = 0x8, scoped, tag = 'scoped memory for tpu_custom_call.1']
    #allocation5 [shape = 'u8[8192]{0}', space=vmem, size = 0x2000, scoped, tag = 'input window, operand 1']
    #allocation6 [shape = 's32[2]{0}', space=sflag, size = 0x8, scoped, tag = 'scoped memory for tpu_custom_call.1']
    #allocation7 [shape = 'u8[65536]{0}', space=vmem, size = 0x10000, scoped, tag = 'input window, operand 2, single buffered']
    #allocation8 [shape = 'u8[8192]{0}', space=vmem, size = 0x2000, scoped, tag = 'input window, operand 3, single buffered']
    #allocation9 [shape = 's32[1]{0}', space=sflag, size = 0x4, scoped, tag = 'scoped memory for tpu_custom_call.1']
    #allocation10 [shape = 'u8[8192]{0}', space=vmem, size = 0x2000, scoped, tag = 'output window, operand 0']
    %9 = vsyncpa [#allocation3], 0
    %s10 = scalar_lea.sflag [#allocation3], 1
    %11 = vsyncpa %s10, 0
    %12 = vsyncpa [#allocation6], 0
    %s13 = scalar_lea.sflag [#allocation6], 1
    %14 = vsyncpa %s13, 0
    %15 = vsyncpa [#allocation9], 0
    %16 = vsyncpa [#allocation4], 0
    %s17 = scalar_lea.sflag [#allocation4], 1
    %18 = vsyncpa %s17, 0
    loop: start=0, step=1, limit=4
    $region2: #{tpu_custom_call.1} parent=1 // loop_pre_header
      _
    $region3: #{tpu_custom_call.1} parent=1 // loop_header
      %s20 = sphi 0, %s24
      %p21 = scmp.ge.s32.totalorder %s20, 4
      %s30 = sphi 0, %s32
      %s33 = sphi 0, %s30
      %s34 = sphi 0, %s33
      %s50 = sphi 0, %s34
      %s56 = sphi 0, %s58
      %s59 = sphi 0, %s56
      %s60 = sphi 0, %s59
      %s76 = sphi 0, %s60
      %s80 = sphi 0, %s80
      %s82 = sphi 0, %s80
      %s83 = sphi 0, %s82
      %s97 = sphi 0, %s83
      %s101 = sphi 0, %s101
      %s103 = sphi 0, %s101
      %s104 = sphi 0, %s103
      %s118 = sphi 0, %s104
      %s124 = sphi 0, %s126
      %s127 = sphi 0, %s124
      %s128 = sphi 0, %s127
      %s144 = sphi 0, %s128
    $region4: #{tpu_custom_call.1} parent=1 // loop_header_branch
      %23 = sbr.rel (%p21) target = $region8
    $region5: #{tpu_custom_call.1} parent=1 // loop_body
      %s25 = ssub.s32 %s20, 1
      %s26 = ssub.s32 %s20, 2
      %s27 = sadd.s32 %s20, 1
      %s28 = ssub.s32 %s20, %s27
      %p29 = scmp.eq.s32.totalorder %s28, 0
      %s31 = sadd.s32 %s30, 1
      %s32 = scalar_select %p29, %s30, %s31
      %p35 = pneg %p29
      %p36 = scmp.eq.s32.totalorder %s20, 1
      %p37 = por %p35, %p36
      %p38 = scmp.ne.s32.totalorder %s30, %s33
      %p39 = scmp.eq.s32.totalorder %s20, 0
      %p40 = por %p38, %p39
      %p41 = scmp.ne.s32.totalorder %s30, %s33
      %p42 = scmp.eq.s32.totalorder %s25, 1
      %p43 = por %p41, %p42
      %p44 = scmp.ne.s32.totalorder %s33, %s34
      %p45 = scmp.eq.s32.totalorder %s25, 0
      %p46 = por %p44, %p45
      %p47 = scmp.ne.s32.totalorder %s33, %s34
      %p48 = scmp.eq.s32.totalorder %s26, 1
      %p49 = por %p47, %p48
      %p51 = scmp.ne.s32.totalorder %s34, %s50
      %p52 = scmp.eq.s32.totalorder %s26, 0
      %p53 = por %p51, %p52
      %s54 = ssub.s32 %s20, %s27
      %p55 = scmp.eq.s32.totalorder %s54, 0
      %s57 = sadd.s32 %s56, 1
      %s58 = scalar_select %p55, %s56, %s57
      %p61 = pneg %p55
      %p62 = scmp.eq.s32.totalorder %s20, 1
      %p63 = por %p61, %p62
      %p64 = scmp.ne.s32.totalorder %s56, %s59
      %p65 = scmp.eq.s32.totalorder %s20, 0
      %p66 = por %p64, %p65
      %p67 = scmp.ne.s32.totalorder %s56, %s59
      %p68 = scmp.eq.s32.totalorder %s25, 1
      %p69 = por %p67, %p68
      %p70 = scmp.ne.s32.totalorder %s59, %s60
      %p71 = scmp.eq.s32.totalorder %s25, 0
      %p72 = por %p70, %p71
      %p73 = scmp.ne.s32.totalorder %s59, %s60
      %p74 = scmp.eq.s32.totalorder %s26, 1
      %p75 = por %p73, %p74
      %p77 = scmp.ne.s32.totalorder %s60, %s76
      %p78 = scmp.eq.s32.totalorder %s26, 0
      %p79 = por %p77, %p78
      %s81 = sadd.s32 %s80, 1
      %p84 = scmp.eq.s32.totalorder %s20, 1
      %p85 = scmp.ne.s32.totalorder %s80, %s82
      %p86 = scmp.eq.s32.totalorder %s20, 0
      %p87 = por %p85, %p86
      %p88 = scmp.ne.s32.totalorder %s80, %s82
      %p89 = scmp.eq.s32.totalorder %s25, 1
      %p90 = por %p88, %p89
      %p91 = scmp.ne.s32.totalorder %s82, %s83
      %p92 = scmp.eq.s32.totalorder %s25, 0
      %p93 = por %p91, %p92
      %p94 = scmp.ne.s32.totalorder %s82, %s83
      %p95 = scmp.eq.s32.totalorder %s26, 1
      %p96 = por %p94, %p95
      %p98 = scmp.ne.s32.totalorder %s83, %s97
      %p99 = scmp.eq.s32.totalorder %s26, 0
      %p100 = por %p98, %p99
      %s102 = sadd.s32 %s101, 1
      %p105 = scmp.eq.s32.totalorder %s20, 1
      %p106 = scmp.ne.s32.totalorder %s101, %s103
      %p107 = scmp.eq.s32.totalorder %s20, 0
      %p108 = por %p106, %p107
      %p109 = scmp.ne.s32.totalorder %s101, %s103
      %p110 = scmp.eq.s32.totalorder %s25, 1
      %p111 = por %p109, %p110
      %p112 = scmp.ne.s32.totalorder %s103, %s104
      %p113 = scmp.eq.s32.totalorder %s25, 0
      %p114 = por %p112, %p113
      %p115 = scmp.ne.s32.totalorder %s103, %s104
      %p116 = scmp.eq.s32.totalorder %s26, 1
      %p117 = por %p115, %p116
      %p119 = scmp.ne.s32.totalorder %s104, %s118
      %p120 = scmp.eq.s32.totalorder %s26, 0
      %p121 = por %p119, %p120
      %s122 = ssub.s32 %s20, %s27
      %p123 = scmp.eq.s32.totalorder %s122, 0
      %s125 = sadd.s32 %s124, 1
      %s126 = scalar_select %p123, %s124, %s125
      %p129 = pneg %p123
      %p130 = scmp.eq.s32.totalorder %s20, 1
      %p131 = por %p129, %p130
      %p132 = scmp.ne.s32.totalorder %s124, %s127
      %p133 = scmp.eq.s32.totalorder %s20, 0
      %p134 = por %p132, %p133
      %p135 = scmp.ne.s32.totalorder %s124, %s127
      %p136 = scmp.eq.s32.totalorder %s25, 1
      %p137 = por %p135, %p136
      %p138 = scmp.ne.s32.totalorder %s127, %s128
      %p139 = scmp.eq.s32.totalorder %s25, 0
      %p140 = por %p138, %p139
      %p141 = scmp.ne.s32.totalorder %s127, %s128
      %p142 = scmp.eq.s32.totalorder %s26, 1
      %p143 = por %p141, %p142
      %p145 = scmp.ne.s32.totalorder %s128, %s144
      %p146 = scmp.eq.s32.totalorder %s26, 0
      %p147 = por %p145, %p146
      %p148 = scmp.le.s32.totalorder 1, %s20
      %p149 = scmp.lt.s32.totalorder %s20, 3
      %p150 = pnand %p148, %p149
      %p151 = pneg %p150
      // Predicated region
      $region9: #{tpu_custom_call.1} parent=5 // pred_check
        _
      $region10: #{tpu_custom_call.1} parent=5 // pred_check_branch
        %153 = sbr.rel (%p150) target = $region12
      $region11: #{tpu_custom_call.1} parent=5 // pred_region
        %s154 = ssub.s32 %s20, 1
        // Predicated region
        $region13: #{tpu_custom_call.1} parent=11 // pred_check
          %p155 = pneg %p93
        $region14: #{tpu_custom_call.1} parent=11 // pred_check_branch
          %157 = sbr.rel (%p155) target = $region16
        $region15: #{tpu_custom_call.1} parent=11 // pred_region
          %s159 = ssub.s32 2048, 2048
          %160 = vsyncadd [#allocation6], %s159
          %s161 = sshll.u32 [#allocation7], 4
          %s162 = int_to_ptr.vmem [resolvable:$true] %s161
          %167 = dma.hbm_to_vmem [thread:$0]  %s2, 2048, %s162, [#allocation6], 128, 128, 8
        $region16: #{tpu_custom_call.1} parent=11 // pred_fallthru
          _
        // Predicated region
        $region17: #{tpu_custom_call.1} parent=11 // pred_check
          %p168 = pneg %p114
        $region18: #{tpu_custom_call.1} parent=11 // pred_check_branch
          %170 = sbr.rel (%p168) target = $region20
        $region19: #{tpu_custom_call.1} parent=11 // pred_region
          %s172 = ssub.s32 256, 256
          %173 = vsyncadd [#allocation9], %s172
          %s174 = sshll.u32 [#allocation8], 4
          %s175 = int_to_ptr.vmem [resolvable:$true] %s174
          %180 = dma.hbm_to_vmem [thread:$0]  %s3, 256, %s175, [#allocation9], 128, 128, 8
        $region20: #{tpu_custom_call.1} parent=11 // pred_fallthru
          _
      $region12: #{tpu_custom_call.1} parent=5 // pred_fallthru
        _
      %p181 = scmp.lt.s32.totalorder %s20, 2
      // Predicated region
      $region21: #{tpu_custom_call.1} parent=5 // pred_check
        %p182 = pneg %p181
      $region22: #{tpu_custom_call.1} parent=5 // pred_check_branch
        %184 = sbr.rel (%p182) target = $region24
      $region23: #{tpu_custom_call.1} parent=5 // pred_region
        // Predicated region
        $region25: #{tpu_custom_call.1} parent=23 // pred_check
          %p185 = pneg %p40
        $region26: #{tpu_custom_call.1} parent=23 // pred_check_branch
          %187 = sbr.rel (%p185) target = $region28
        $region27: #{tpu_custom_call.1} parent=23 // pred_region
          %s188 = sand.u32 %s30, 1
          %s189 = scalar_lea.sflag [#allocation3], %s188
          %s190 = sand.u32 %s30, 1
          %s191 = smul.addr %s190, 8
          %s192 = scalar_lea.vmem [#allocation2], %s191
          %s194 = ssub.s32 128, 128
          %195 = vsyncadd %s189, %s194
          %s196 = smul.addr %s20, 128
          %s197 = scalar_lea.hbm %s0, %s196
          %s199 = sshll.u32 %s192, 4
          %s200 = int_to_ptr.vmem [resolvable:$true] %s199
          %202 = dma.hbm_to_vmem [thread:$0]  %s197, 128, %s200, %s189
        $region28: #{tpu_custom_call.1} parent=23 // pred_fallthru
          _
        // Predicated region
        $region29: #{tpu_custom_call.1} parent=23 // pred_check
          %p203 = pneg %p66
        $region30: #{tpu_custom_call.1} parent=23 // pred_check_branch
          %205 = sbr.rel (%p203) target = $region32
        $region31: #{tpu_custom_call.1} parent=23 // pred_region
          %s206 = sand.u32 %s20, 1
          %s207 = scalar_lea.sflag [#allocation6], %s206
          %s208 = sand.u32 %s56, 1
          %s209 = smul.addr %s208, 8
          %s210 = scalar_lea.vmem [#allocation5], %s209
          %s212 = ssub.s32 128, 128
          %213 = vsyncadd %s207, %s212
          %s214 = smul.addr %s20, 128
          %s215 = scalar_lea.hbm %s1, %s214
          %s217 = sshll.u32 %s210, 4
          %s218 = int_to_ptr.vmem [resolvable:$true] %s217
          %220 = dma.hbm_to_vmem [thread:$0]  %s215, 128, %s218, %s207
        $region32: #{tpu_custom_call.1} parent=23 // pred_fallthru
          _
      $region24: #{tpu_custom_call.1} parent=5 // pred_fallthru
        _
      %p221 = scmp.le.s32.totalorder 1, %s20
      %p222 = scmp.lt.s32.totalorder %s20, 3
      %p223 = pnand %p221, %p222
      %p224 = pneg %p223
      // Predicated region
      $region33: #{tpu_custom_call.1} parent=5 // pred_check
        _
      $region34: #{tpu_custom_call.1} parent=5 // pred_check_branch
        %226 = sbr.rel (%p223) target = $region36
      $region35: #{tpu_custom_call.1} parent=5 // pred_region
        %s227 = ssub.s32 %s20, 1
        %s228 = sand.u32 %s33, 1
        %s229 = scalar_lea.sflag [#allocation3], %s228
        %s230 = sand.u32 %s33, 1
        %s231 = smul.addr %s230, 8
        %s232 = scalar_lea.vmem [#allocation2], %s231
        // Predicated region
        $region37: #{tpu_custom_call.1} parent=35 // pred_check
          %p233 = pneg %p46
        $region38: #{tpu_custom_call.1} parent=35 // pred_check_branch
          %235 = sbr.rel (%p233) target = $region40
        $region39: #{tpu_custom_call.1} parent=35 // pred_region
          %236 = dma.done %s229, 128
        $region40: #{tpu_custom_call.1} parent=35 // pred_fallthru
          _
        %s237 = sand.u32 %s25, 1
        %s238 = scalar_lea.sflag [#allocation6], %s237
        %s239 = sand.u32 %s59, 1
        %s240 = smul.addr %s239, 8
        %s241 = scalar_lea.vmem [#allocation5], %s240
        // Predicated region
        $region41: #{tpu_custom_call.1} parent=35 // pred_check
          %p242 = pneg %p72
        $region42: #{tpu_custom_call.1} parent=35 // pred_check_branch
          %244 = sbr.rel (%p242) target = $region44
        $region43: #{tpu_custom_call.1} parent=35 // pred_region
          %245 = dma.done %s238, 128
        $region44: #{tpu_custom_call.1} parent=35 // pred_fallthru
          _
        // Predicated region
        $region45: #{tpu_custom_call.1} parent=35 // pred_check
          %p246 = pneg %p93
        $region46: #{tpu_custom_call.1} parent=35 // pred_check_branch
          %248 = sbr.rel (%p246) target = $region48
        $region47: #{tpu_custom_call.1} parent=35 // pred_region
          %249 = dma.done [#allocation6], 2048
        $region48: #{tpu_custom_call.1} parent=35 // pred_fallthru
          _
        // Predicated region
        $region49: #{tpu_custom_call.1} parent=35 // pred_check
          %p250 = pneg %p114
        $region50: #{tpu_custom_call.1} parent=35 // pred_check_branch
          %252 = sbr.rel (%p250) target = $region52
        $region51: #{tpu_custom_call.1} parent=35 // pred_region
          %253 = dma.done [#allocation9], 256
        $region52: #{tpu_custom_call.1} parent=35 // pred_fallthru
          _
        %s254 = sand.u32 %s33, 1
        %s255 = scalar_lea.sflag [#allocation3], %s254
        %s256 = sand.u32 %s33, 1
        %s257 = smul.addr %s256, 8
        %s258 = scalar_lea.vmem [#allocation2], %s257
        %p259 = pneg %p46
        %p260 = pneg %p43
        %s261 = sand.u32 %s25, 1
        %s262 = scalar_lea.sflag [#allocation6], %s261
        %s263 = sand.u32 %s59, 1
        %s264 = smul.addr %s263, 8
        %s265 = scalar_lea.vmem [#allocation5], %s264
        %p266 = pneg %p72
        %p267 = pneg %p69
        %p268 = pneg %p93
        %p269 = pneg %p90
        %p270 = pneg %p114
        %p271 = pneg %p111
        %p272 = pneg %p140
        %p273 = pneg %p137
        %s274 = sand.u32 %s127, 1
        %s275 = scalar_lea.sflag [#allocation4], %s274
        %s276 = sand.u32 %s127, 1
        %s277 = smul.addr %s276, 8
        %s278 = scalar_lea.vmem [#allocation10], %s277
        %v279 = vld [vmem:[%s232] sm:$0xff]
        %v280 = vand.u32 2147483647, %v279
        %v281 = vsub.f32 0.0, %v280
        %v282 = vmul.f32 %v281, 1.442695
        %v283 = vpow.pop %v282
        %v284 = vadd.f32 %v283, 1.0
        %v285 = vlog2.pop %v284
        %v286 = vmul.f32 %v285, 0.6931472
        %v287 = vmax.f32 %v279, 0.0
        %v288 = vadd.f32 %v287, %v286
        %v289 = vsub.f32 %v288, %v279
        %v290 = vsub.f32 0.0, %v289
        %v291 = vmul.f32 %v290, 1.442695
        %v292 = vpow.pop %v291
        %v293 = vsub.f32 1.0, %v292
        %v294 = vmul.f32 %v292, %v292
        %v295 = vmul.f32 %v294, 0.75
        %v296 = vmul.f32 %v295, %v288
        %v297 = vmul.f32 %v293, %v293
        %v298 = vmul.f32 %v297, 0.25
        %v299 = vmul.f32 %v298, %v289
        %v300 = vsub.f32 %v299, %v296
        %301 = vadd.xlane.f32.xlu0 %v296
        %v302 = vpop.xlane.xlu0 %301
        %v303 = vld [vmem:[#allocation7] sm:$0xff]
        %v304 = vld [vmem:[#allocation7 + $0x8] sm:$0xff]
        %v305 = vld [vmem:[#allocation7 + $0x10] sm:$0xff]
        %v306 = vld [vmem:[#allocation7 + $0x18] sm:$0xff]
        %v307 = vld [vmem:[#allocation7 + $0x20] sm:$0xff]
        %v308 = vld [vmem:[#allocation7 + $0x28] sm:$0xff]
        %v309 = vld [vmem:[#allocation7 + $0x30] sm:$0xff]
        %v310 = vld [vmem:[#allocation7 + $0x38] sm:$0xff]
        %v311 = vld [vmem:[#allocation7 + $0x40] sm:$0xff]
        %v312 = vld [vmem:[#allocation7 + $0x48] sm:$0xff]
        %v313 = vld [vmem:[#allocation7 + $0x50] sm:$0xff]
        %v314 = vld [vmem:[#allocation7 + $0x58] sm:$0xff]
        %v315 = vld [vmem:[#allocation7 + $0x60] sm:$0xff]
        %v316 = vld [vmem:[#allocation7 + $0x68] sm:$0xff]
        %v317 = vld [vmem:[#allocation7 + $0x70] sm:$0xff]
        %v318 = vld [vmem:[#allocation7 + $0x78] sm:$0xff]
        %319 = vmatprep.subr.mxu0 0.0
        %320 = vmatpush1.xpose.msra.mxu0 %v318
        %321 = vmatprep.subr.mxu0 0.0
        %322 = vmatpush1.xpose.msra.mxu0 %v317
        %323 = vmatprep.subr.mxu0 0.0
        %324 = vmatpush1.xpose.msra.mxu0 %v316
        %325 = vmatprep.subr.mxu0 0.0
        %326 = vmatpush1.xpose.msra.mxu0 %v315
        %327 = vmatprep.subr.mxu0 0.0
        %328 = vmatpush1.xpose.msra.mxu0 %v314
        %329 = vmatprep.subr.mxu0 0.0
        %330 = vmatpush1.xpose.msra.mxu0 %v313
        %331 = vmatprep.subr.mxu0 0.0
        %332 = vmatpush1.xpose.msra.mxu0 %v312
        %333 = vmatprep.subr.mxu0 0.0
        %334 = vmatpush1.xpose.msra.mxu0 %v311
        %335 = vmatprep.subr.mxu0 0.0
        %336 = vmatpush1.xpose.msra.mxu0 %v310
        %337 = vmatprep.subr.mxu0 0.0
        %338 = vmatpush1.xpose.msra.mxu0 %v309
        %339 = vmatprep.subr.mxu0 0.0
        %340 = vmatpush1.xpose.msra.mxu0 %v308
        %341 = vmatprep.subr.mxu0 0.0
        %342 = vmatpush1.xpose.msra.mxu0 %v307
        %343 = vmatprep.subr.mxu0 0.0
        %344 = vmatpush1.xpose.msra.mxu0 %v306
        %345 = vmatprep.subr.mxu0 0.0
        %346 = vmatpush1.xpose.msra.mxu0 %v305
        %347 = vmatprep.subr.mxu0 0.0
        %348 = vmatpush1.xpose.msra.mxu0 %v304
        %349 = vmatprep.subr.mxu0 0.0
        %350 = vmatpush1.xpose.msra.mxu0 %v303
        %351 = vmatprep.subr.mxu0 0.0
        %352 = vmatpush2.xpose.msra.mxu0 0.0
        %353 = vmatprep.subr.mxu0 0.0
        %354 = vmatpush2.xpose.msra.mxu0 0.0
        %355 = vmatprep.subr.mxu0 0.0
        %356 = vmatpush2.xpose.msra.mxu0 0.0
        %357 = vmatprep.subr.mxu0 0.0
        %358 = vmatpush2.xpose.msra.mxu0 0.0
        %359 = vmatprep.subr.mxu0 0.0
        %360 = vmatpush2.xpose.msra.mxu0 0.0
        %361 = vmatprep.subr.mxu0 0.0
        %362 = vmatpush2.xpose.msra.mxu0 0.0
        %363 = vmatprep.subr.mxu0 0.0
        %364 = vmatpush2.xpose.msra.mxu0 0.0
        %365 = vmatprep.subr.mxu0 0.0
        %366 = vmatpush2.xpose.msra.mxu0 0.0
        %367 = vmatprep.subr.mxu0 0.0
        %368 = vmatpush2.xpose.msra.mxu0 0.0
        %369 = vmatprep.subr.mxu0 0.0
        %370 = vmatpush2.xpose.msra.mxu0 0.0
        %371 = vmatprep.subr.mxu0 0.0
        %372 = vmatpush2.xpose.msra.mxu0 0.0
        %373 = vmatprep.subr.mxu0 0.0
        %374 = vmatpush2.xpose.msra.mxu0 0.0
        %375 = vmatprep.subr.mxu0 0.0
        %376 = vmatpush2.xpose.msra.mxu0 0.0
        %377 = vmatprep.subr.mxu0 0.0
        %378 = vmatpush2.xpose.msra.mxu0 0.0
        %379 = vmatprep.subr.mxu0 0.0
        %380 = vmatpush2.xpose.msra.mxu0 0.0
        %381 = vmatprep.subr.mxu0 0.0
        %382 = vmatpush2.xpose.msra.mxu0 0.0
        %383 = vmatprep.mubr.f32.mxu0 0.0
        %384 = vmatmul.mubr.f32.gmra.mxu0 %v300
        %v385 = vpop.f32.mrf.mxu0
        %v386 = vadd.f32 0.0, %v385
        %v387 = vpop.f32.mrf.mxu0
        %388 = vdwg.mxu0
        %v389 = vadd.f32 %v302, %v386
        %v390 = vld [vmem:[%s241] sm:$0xff]
        %v391 = vld [vmem:[#allocation8] sm:$0xff]
        %v392 = vld [vmem:[#allocation8 + $0x8] sm:$0xff]
        %394 = vset.pattern.permute.xlu0 0
        %395 = vperm.xlu0 %394, %v390
        %v396 = vpop.permute.xlu0 %395
        %v398 = vlaneseq
        %v399 = vshrl.u32 %v398, 7
        %v400 = vsub.s32 0, %v399
        %v401 = vrot.slane %v391, %v400
        %v402 = vsub.f32 %v396, %v401
        %v403 = vand.u32 2147483647, %v402
        %404 = vset.pattern.permute.xlu0 1
        %405 = vperm.xlu0 %404, %v390
        %v406 = vpop.permute.xlu0 %405
        %v408 = vlaneseq
        %v409 = vshrl.u32 %v408, 7
        %v410 = vsub.s32 1, %v409
        %v411 = vrot.slane %v391, %v410
        %v412 = vsub.f32 %v406, %v411
        %v413 = vand.u32 2147483647, %v412
        %v414 = vadd.f32 %v403, %v413
        %415 = vset.pattern.permute.xlu0 2
        %416 = vperm.xlu0 %415, %v390
        %v417 = vpop.permute.xlu0 %416
        %v419 = vlaneseq
        %v420 = vshrl.u32 %v419, 7
        %v421 = vsub.s32 2, %v420
        %v422 = vrot.slane %v391, %v421
        %v423 = vsub.f32 %v417, %v422
        %v424 = vand.u32 2147483647, %v423
        %v425 = vadd.f32 %v414, %v424
        %426 = vset.pattern.permute.xlu0 3
        %427 = vperm.xlu0 %426, %v390
        %v428 = vpop.permute.xlu0 %427
        %v430 = vlaneseq
        %v431 = vshrl.u32 %v430, 7
        %v432 = vsub.s32 3, %v431
        %v433 = vrot.slane %v391, %v432
        %v434 = vsub.f32 %v428, %v433
        %v435 = vand.u32 2147483647, %v434
        %v436 = vadd.f32 %v425, %v435
        %437 = vset.pattern.permute.xlu0 6
        %438 = vperm.xlu0 %437, %v390
        %v439 = vpop.permute.xlu0 %438
        %v441 = vlaneseq
        %v442 = vshrl.u32 %v441, 7
        %v443 = vsub.s32 6, %v442
        %v444 = vrot.slane %v391, %v443
        %v445 = vmin.f32 %v439, %v444
        %446 = vset.pattern.permute.xlu0 4
        %447 = vperm.xlu0 %446, %v390
        %v448 = vpop.permute.xlu0 %447
        %v450 = vlaneseq
        %v451 = vshrl.u32 %v450, 7
        %v452 = vsub.s32 4, %v451
        %v453 = vrot.slane %v391, %v452
        %v454 = vmax.f32 %v448, %v453
        %v455 = vsub.f32 %v445, %v454
        %v456 = vmax.f32 %v455, 0.0
        %457 = vset.pattern.permute.xlu0 7
        %458 = vperm.xlu0 %457, %v390
        %v459 = vpop.permute.xlu0 %458
        %v461 = vlaneseq
        %v462 = vshrl.u32 %v461, 7
        %v463 = vsub.s32 7, %v462
        %v464 = vrot.slane %v391, %v463
        %v465 = vmin.f32 %v459, %v464
        %466 = vset.pattern.permute.xlu0 5
        %467 = vperm.xlu0 %466, %v390
        %v468 = vpop.permute.xlu0 %467
        %v470 = vlaneseq
        %v471 = vshrl.u32 %v470, 7
        %v472 = vsub.s32 5, %v471
        %v473 = vrot.slane %v391, %v472
        %v474 = vmax.f32 %v468, %v473
        %v475 = vsub.f32 %v465, %v474
        %v476 = vmax.f32 %v475, 0.0
        %v477 = vmul.f32 %v456, %v476
        %478 = vset.pattern.permute.xlu0 8
        %479 = vperm.xlu0 %478, %v390
        %v480 = vpop.permute.xlu0 %479
        %v482 = vlaneseq
        %v483 = vshrl.u32 %v482, 7
        %v484 = vsub.s32 0, %v483
        %v485 = vrot.slane %v392, %v484
        %v486 = vadd.f32 %v480, %v485
        %v487 = vsub.f32 %v486, %v477
        %v488 = vmax.f32 %v439, %v444
        %v489 = vmin.f32 %v448, %v453
        %v490 = vsub.f32 %v488, %v489
        %v491 = vmax.f32 %v459, %v464
        %v492 = vmin.f32 %v468, %v473
        %v493 = vsub.f32 %v491, %v492
        %v494 = vmul.f32 %v490, %v493
        %v495 = vmul.f32 %v477, %v494
        %v496 = vsub.f32 %v494, %v487
        %v497 = vmul.f32 %v496, %v487
        %v498 = vsub.f32 %v495, %v497
        %v499 = vmul.f32 %v487, %v494
        %v500 = vrcp.pop %v499
        %v501 = vmul.f32 %v498, %v500
        %v502 = vadd.f32 %v436, %v389
        %v503 = vsub.f32 0.0, %v501
        %v504 = vadd.f32 %v502, %v503
        %505 = vst [vmem:[%s278] sm:$0xff] %v504
        %s506 = sand.u32 %s127, 1
        %s507 = scalar_lea.sflag [#allocation4], %s506
        %s508 = sand.u32 %s127, 1
        %s509 = smul.addr %s508, 8
        %s510 = scalar_lea.vmem [#allocation10], %s509
        // Predicated region
        $region53: #{tpu_custom_call.1} parent=35 // pred_check
          %p511 = pneg %p137
        $region54: #{tpu_custom_call.1} parent=35 // pred_check_branch
          %513 = sbr.rel (%p511) target = $region56
        $region55: #{tpu_custom_call.1} parent=35 // pred_region
          %s515 = ssub.s32 128, 128
          %516 = vsyncadd %s507, %s515
          %s517 = smul.addr %s25, 128
          %s518 = scalar_lea.hbm %s4, %s517
          %s520 = sshll.u32 %s510, 4
          %s521 = int_to_ptr.vmem [resolvable:$true] %s520
          %523 = dma.vmem_to_hbm [thread:$0]  %s521, 128, %s518, %s507
        $region56: #{tpu_custom_call.1} parent=35 // pred_fallthru
          _
      $region36: #{tpu_custom_call.1} parent=5 // pred_fallthru
        _
      %p524 = scmp.le.s32.totalorder 2, %s20
      // Predicated region
      $region57: #{tpu_custom_call.1} parent=5 // pred_check
        %p525 = pneg %p524
      $region58: #{tpu_custom_call.1} parent=5 // pred_check_branch
        %527 = sbr.rel (%p525) target = $region60
      $region59: #{tpu_custom_call.1} parent=5 // pred_region
        %s528 = ssub.s32 %s20, 2
        // Predicated region
        $region61: #{tpu_custom_call.1} parent=59 // pred_check
          %p529 = pneg %p143
        $region62: #{tpu_custom_call.1} parent=59 // pred_check_branch
          %531 = sbr.rel (%p529) target = $region64
        $region63: #{tpu_custom_call.1} parent=59 // pred_region
          %s532 = sand.u32 %s128, 1
          %s533 = scalar_lea.sflag [#allocation4], %s532
          %s534 = sand.u32 %s128, 1
          %s535 = smul.addr %s534, 8
          %s536 = scalar_lea.vmem [#allocation10], %s535
          %537 = dma.done %s533, 128
        $region64: #{tpu_custom_call.1} parent=59 // pred_fallthru
          _
      $region60: #{tpu_custom_call.1} parent=5 // pred_fallthru
        _
    $region6: #{tpu_custom_call.1} parent=1 // loop_footer
      %s24 = sadd.s32 1, %s20
    $region7: #{tpu_custom_call.1} parent=1 // loop_footer_branch
      %19 = sbr.rel target = $region3
    $region8: #{tpu_custom_call.1} parent=1 // loop_exit
      _
    %538 = vsyncpa [#allocation3], 1
    %s539 = scalar_lea.sflag [#allocation3], 1
    %540 = vsyncpa %s539, 1
    %541 = vsyncpa [#allocation6], 1
    %s542 = scalar_lea.sflag [#allocation6], 1
    %543 = vsyncpa %s542, 1
    %544 = vsyncpa [#allocation9], 1
    %545 = vsyncpa [#allocation4], 1
    %s546 = scalar_lea.sflag [#allocation4], 1
    %547 = vsyncpa %s546, 1

</llo_original>
